<compile_context>
chip_gen: v5e
topology: v5e:2x2
jax: 0.10.0
libtpu: 0.0.40
codegen_flags: <defaults>
</compile_context>

<pallas_src>
import jax
import jax.numpy as jnp
from jax.experimental import pallas as pl
from jax.experimental.pallas import tpu as pltpu

FEAT = 1000          # backbone feature dim
FEAT_PAD = 1024      # K padded to a multiple of 128 (zero rows/cols)
H1 = 256
H2 = 128
HEAD_CLASSES = (2, 7, 6, 17, 20)
NUM_HEADS = len(HEAD_CLASSES)
C_PAD = 128          # final layer output padded to lane-dense 128; sliced outside


def _heads_kernel(x_ref, w1_ref, b1_ref, w2_ref, b2_ref, w3_ref, b3_ref, o_ref):
    """One grid step = one classifier head: (B,1024) -> (B,128 padded logits)."""
    x = x_ref[...]                                                  # (B, 1024)
    h1 = jnp.dot(x, w1_ref[0], preferred_element_type=jnp.float32) + b1_ref[0]
    h1 = jnp.maximum(h1, 0.0)                                       # ReLU
    # Dropout2d(0.5): identity at inference time.
    h2 = jnp.dot(h1, w2_ref[0], preferred_element_type=jnp.float32) + b2_ref[0]
    h2 = jnp.maximum(h2, 0.0)                                       # ReLU
    o_ref[0] = (jnp.dot(h2, w3_ref[0], preferred_element_type=jnp.float32)
                + b3_ref[0])                                        # (B, C_PAD)


def _run_heads(x_pad, w1s, b1s, w2s, b2s, w3s, b3s):
    """Single fused pallas_call over the 5 heads. x_pad: (B, FEAT_PAD) f32."""
    B = x_pad.shape[0]
    flops = 2 * B * NUM_HEADS * (FEAT_PAD * H1 + H1 * H2 + H2 * C_PAD)
    bytes_accessed = 4 * (x_pad.size + w1s.size + b1s.size + w2s.size
                          + b2s.size + w3s.size + b3s.size
                          + NUM_HEADS * B * C_PAD)
    return pl.pallas_call(
        _heads_kernel,
        out_shape=jax.ShapeDtypeStruct((NUM_HEADS, B, C_PAD), jnp.float32),
        grid=(NUM_HEADS,),
        in_specs=[
            # x stays VMEM-resident across all heads.
            pl.BlockSpec((B, FEAT_PAD), lambda h: (0, 0)),
            # per-head stacked weights/biases — pipelined across the head axis.
            pl.BlockSpec((1, FEAT_PAD, H1), lambda h: (h, 0, 0)),
            pl.BlockSpec((1, 1, H1), lambda h: (h, 0, 0)),
            pl.BlockSpec((1, H1, H2), lambda h: (h, 0, 0)),
            pl.BlockSpec((1, 1, H2), lambda h: (h, 0, 0)),
            pl.BlockSpec((1, H2, C_PAD), lambda h: (h, 0, 0)),
            pl.BlockSpec((1, 1, C_PAD), lambda h: (h, 0, 0)),
        ],
        out_specs=pl.BlockSpec((1, B, C_PAD), lambda h: (h, 0, 0)),
        compiler_params=pltpu.CompilerParams(
            dimension_semantics=("parallel",)),   # heads are independent -> megacore
        cost_estimate=pl.CostEstimate(
            flops=flops, transcendentals=0, bytes_accessed=bytes_accessed),
    )(x_pad, w1s, b1s, w2s, b2s, w3s, b3s)


def _init_linear(key, fan_in, fan_out):
    """Deterministic init mimicking nn.Linear default (uniform ±1/sqrt(fan_in))."""
    kw, kb = jax.random.split(key)
    bound = 1.0 / jnp.sqrt(float(fan_in))
    w = jax.random.uniform(kw, (fan_in, fan_out), jnp.float32, -bound, bound)
    b = jax.random.uniform(kb, (1, fan_out), jnp.float32, -bound, bound)
    return w, b


def init_params(key):
    """Build stacked, padded params for the 5 classifier heads."""
    w1_list, b1_list, w2_list, b2_list, w3_list, b3_list = [], [], [], [], [], []
    for h, num_classes in enumerate(HEAD_CLASSES):
        k1, k2, k3 = jax.random.split(jax.random.fold_in(key, h), 3)
        w1, b1 = _init_linear(k1, FEAT, H1)
        w2, b2 = _init_linear(k2, H1, H2)
        w3, b3 = _init_linear(k3, H2, num_classes)
        # pad K (zero rows: padded x columns are zero too, so numerics unchanged)
        w1p = jnp.zeros((FEAT_PAD, H1), jnp.float32).at[:FEAT, :].set(w1)
        # pad final layer to a lane-dense 128-wide output (zero columns sliced off)
        w3p = jnp.zeros((H2, C_PAD), jnp.float32).at[:, :num_classes].set(w3)
        b3p = jnp.zeros((1, C_PAD), jnp.float32).at[:, :num_classes].set(b3)
        w1_list.append(w1p); b1_list.append(b1)
        w2_list.append(w2);  b2_list.append(b2)
        w3_list.append(w3p); b3_list.append(b3p)
    return (jnp.stack(w1_list), jnp.stack(b1_list),
            jnp.stack(w2_list), jnp.stack(b2_list),
            jnp.stack(w3_list), jnp.stack(b3_list))


@jax.jit
def resnet18_heads_forward(x, params):
    """Forward pass matching ResNet18.forward semantics on the backbone features.

    x: (B, 1000) f32 backbone features.
    Returns a 5-tuple of logits: shapes (B,2), (B,7), (B,6), (B,17), (B,20).
    """
    w1s, b1s, w2s, b2s, w3s, b3s = params
    B = x.shape[0]
    x_pad = jnp.zeros((B, FEAT_PAD), x.dtype).at[:, :FEAT].set(x)
    o = _run_heads(x_pad, w1s, b1s, w2s, b2s, w3s, b3s)    # (5, B, 128)
    return tuple(o[i, :, :c] for i, c in enumerate(HEAD_CLASSES))


def _reference_forward(x, params):
    """Pure-JAX reference for correctness checking (same padded params)."""
    w1s, b1s, w2s, b2s, w3s, b3s = params
    B = x.shape[0]
    x_pad = jnp.zeros((B, FEAT_PAD), x.dtype).at[:, :FEAT].set(x)
    outs = []
    for i, num_classes in enumerate(HEAD_CLASSES):
        h1 = jnp.maximum(x_pad @ w1s[i] + b1s[i], 0.0)
        h2 = jnp.maximum(h1 @ w2s[i] + b2s[i], 0.0)
        o = h2 @ w3s[i] + b3s[i]
        outs.append(o[:, :num_classes])
    return tuple(outs)


if __name__ == "__main__":
    key = jax.random.PRNGKey(0)
    kx, kp = jax.random.split(key)

    B = 2
    # x is the 1000-dim backbone ("self.modle") output feature vector.
    x = jax.random.normal(kx, (B, FEAT), jnp.float32)
    params = init_params(kp)

    outs = resnet18_heads_forward(x, params)
    outs = jax.block_until_ready(outs)

    # sanity: shapes + numerics vs pure-JAX reference
    refs = _reference_forward(x, params)
    for o, r, c in zip(outs, refs, HEAD_CLASSES):
        assert o.shape == (B, c), (o.shape, c)
        assert jnp.allclose(o, r, atol=1e-4, rtol=1e-4)

    print("KERNEL_OK")
</pallas_src>

<mosaic_0001>
module attributes {stable_mosaic.version = 11 : i64} {
  func.func @_heads_kernel(%arg0: i32, %arg1: memref<2x1024xf32, #tpu.memory_space<vmem>>, %arg2: memref<1x1024x256xf32, #tpu.memory_space<vmem>>, %arg3: memref<1x1x256xf32, #tpu.memory_space<vmem>>, %arg4: memref<1x256x128xf32, #tpu.memory_space<vmem>>, %arg5: memref<1x1x128xf32, #tpu.memory_space<vmem>>, %arg6: memref<1x128x128xf32, #tpu.memory_space<vmem>>, %arg7: memref<1x1x128xf32, #tpu.memory_space<vmem>>, %arg8: memref<1x2x128xf32, #tpu.memory_space<vmem>>) attributes {dimension_semantics = [#tpu.dimension_semantics<parallel>], iteration_bounds = array<i64: 5>, scalar_prefetch = 0 : i64, scratch_operands = 0 : i64, tpu.core_type = #tpu.core_type<tc>, window_params = [{pipeline_mode = #tpu.pipeline_mode<synchronous>, transform_indices = @transform_0, window_bounds = array<i64: 2, 1024>}, {transform_indices = @transform_1, window_bounds = array<i64: 1, 1024, 256>}, {transform_indices = @transform_2, window_bounds = array<i64: 1, 1, 256>}, {transform_indices = @transform_3, window_bounds = array<i64: 1, 256, 128>}, {transform_indices = @transform_4, window_bounds = array<i64: 1, 1, 128>}, {transform_indices = @transform_5, window_bounds = array<i64: 1, 128, 128>}, {transform_indices = @transform_6, window_bounds = array<i64: 1, 1, 128>}, {transform_indices = @transform_7, window_bounds = array<i64: 1, 2, 128>}]} {
    %c0 = arith.constant 0 : index
    %c0_0 = arith.constant 0 : index
    %0 = vector.load %arg1[%c0, %c0_0] : memref<2x1024xf32, #tpu.memory_space<vmem>>, vector<2x1024xf32>
    %c0_1 = arith.constant 0 : index
    %c0_2 = arith.constant 0 : index
    %c0_3 = arith.constant 0 : index
    %1 = vector.load %arg2[%c0_1, %c0_2, %c0_3] : memref<1x1024x256xf32, #tpu.memory_space<vmem>>, vector<1x1024x256xf32>
    %2 = vector.shape_cast %1 : vector<1x1024x256xf32> to vector<1024x256xf32>
    %cst = arith.constant dense<0.000000e+00> : vector<2x256xf32>
    %3 = tpu.matmul %0, %2, %cst {dimension_numbers = #tpu.dot_dimension_numbers<[1], [0], [0], [1], [0, 0, 1, 1], [], []>} : vector<2x1024xf32>, vector<1024x256xf32>, vector<2x256xf32> -> vector<2x256xf32>
    %c0_4 = arith.constant 0 : index
    %c0_5 = arith.constant 0 : index
    %c0_6 = arith.constant 0 : index
    %4 = vector.load %arg3[%c0_4, %c0_5, %c0_6] : memref<1x1x256xf32, #tpu.memory_space<vmem>>, vector<1x1x256xf32>
    %5 = vector.shape_cast %4 : vector<1x1x256xf32> to vector<1x256xf32>
    %6 = vector.broadcast %5 : vector<1x256xf32> to vector<2x256xf32>
    %7 = arith.addf %3, %6 : vector<2x256xf32>
    %cst_7 = arith.constant 0.000000e+00 : f32
    %8 = vector.broadcast %cst_7 : f32 to vector<2x256xf32>
    %9 = arith.maximumf %7, %8 : vector<2x256xf32>
    %c0_8 = arith.constant 0 : index
    %c0_9 = arith.constant 0 : index
    %c0_10 = arith.constant 0 : index
    %10 = vector.load %arg4[%c0_8, %c0_9, %c0_10] : memref<1x256x128xf32, #tpu.memory_space<vmem>>, vector<1x256x128xf32>
    %11 = vector.shape_cast %10 : vector<1x256x128xf32> to vector<256x128xf32>
    %cst_11 = arith.constant dense<0.000000e+00> : vector<2x128xf32>
    %12 = tpu.matmul %9, %11, %cst_11 {dimension_numbers = #tpu.dot_dimension_numbers<[1], [0], [0], [1], [0, 0, 1, 1], [], []>} : vector<2x256xf32>, vector<256x128xf32>, vector<2x128xf32> -> vector<2x128xf32>
    %c0_12 = arith.constant 0 : index
    %c0_13 = arith.constant 0 : index
    %c0_14 = arith.constant 0 : index
    %13 = vector.load %arg5[%c0_12, %c0_13, %c0_14] : memref<1x1x128xf32, #tpu.memory_space<vmem>>, vector<1x1x128xf32>
    %14 = vector.shape_cast %13 : vector<1x1x128xf32> to vector<1x128xf32>
    %15 = vector.broadcast %14 : vector<1x128xf32> to vector<2x128xf32>
    %16 = arith.addf %12, %15 : vector<2x128xf32>
    %cst_15 = arith.constant 0.000000e+00 : f32
    %17 = vector.broadcast %cst_15 : f32 to vector<2x128xf32>
    %18 = arith.maximumf %16, %17 : vector<2x128xf32>
    %c0_16 = arith.constant 0 : index
    %c0_17 = arith.constant 0 : index
    %c0_18 = arith.constant 0 : index
    %19 = vector.load %arg6[%c0_16, %c0_17, %c0_18] : memref<1x128x128xf32, #tpu.memory_space<vmem>>, vector<1x128x128xf32>
    %20 = vector.shape_cast %19 : vector<1x128x128xf32> to vector<128x128xf32>
    %cst_19 = arith.constant dense<0.000000e+00> : vector<2x128xf32>
    %21 = tpu.matmul %18, %20, %cst_19 {dimension_numbers = #tpu.dot_dimension_numbers<[1], [0], [0], [1], [0, 0, 1, 1], [], []>} : vector<2x128xf32>, vector<128x128xf32>, vector<2x128xf32> -> vector<2x128xf32>
    %c0_20 = arith.constant 0 : index
    %c0_21 = arith.constant 0 : index
    %c0_22 = arith.constant 0 : index
    %22 = vector.load %arg7[%c0_20, %c0_21, %c0_22] : memref<1x1x128xf32, #tpu.memory_space<vmem>>, vector<1x1x128xf32>
    %23 = vector.shape_cast %22 : vector<1x1x128xf32> to vector<1x128xf32>
    %24 = vector.broadcast %23 : vector<1x128xf32> to vector<2x128xf32>
    %25 = arith.addf %21, %24 : vector<2x128xf32>
    %c0_23 = arith.constant 0 : index
    %c0_24 = arith.constant 0 : index
    %c0_25 = arith.constant 0 : index
    %26 = vector.load %arg8[%c0_23, %c0_24, %c0_25] : memref<1x2x128xf32, #tpu.memory_space<vmem>>, vector<1x2x128xf32>
    %27 = vector.shape_cast %26 : vector<1x2x128xf32> to vector<2x128xf32>
    %28 = vector.shape_cast %25 : vector<2x128xf32> to vector<1x2x128xf32>
    tpu.vector_store %arg8[%c0_23, %c0_24, %c0_25], %28 {strides = array<i32>} : memref<1x2x128xf32, #tpu.memory_space<vmem>>, vector<1x2x128xf32>,
    return
  }
  func.func @transform_0(%arg0: i32) -> (i32, i32) {
    %c0_i32 = arith.constant 0 : i32
    %c0_i32_0 = arith.constant 0 : i32
    %c0_i32_1 = arith.constant 0 : i32
    return %c0_i32, %c0_i32_0 : i32, i32
  }
  func.func @transform_1(%arg0: i32) -> (i32, i32, i32) {
    %c0_i32 = arith.constant 0 : i32
    %c0_i32_0 = arith.constant 0 : i32
    %c0_i32_1 = arith.constant 0 : i32
    return %arg0, %c0_i32, %c0_i32_0 : i32, i32, i32
  }
  func.func @transform_2(%arg0: i32) -> (i32, i32, i32) {
    %c0_i32 = arith.constant 0 : i32
    %c0_i32_0 = arith.constant 0 : i32
    %c0_i32_1 = arith.constant 0 : i32
    return %arg0, %c0_i32, %c0_i32_0 : i32, i32, i32
  }
  func.func @transform_3(%arg0: i32) -> (i32, i32, i32) {
    %c0_i32 = arith.constant 0 : i32
    %c0_i32_0 = arith.constant 0 : i32
    %c0_i32_1 = arith.constant 0 : i32
    return %arg0, %c0_i32, %c0_i32_0 : i32, i32, i32
  }
  func.func @transform_4(%arg0: i32) -> (i32, i32, i32) {
    %c0_i32 = arith.constant 0 : i32
    %c0_i32_0 = arith.constant 0 : i32
    %c0_i32_1 = arith.constant 0 : i32
    return %arg0, %c0_i32, %c0_i32_0 : i32, i32, i32
  }
  func.func @transform_5(%arg0: i32) -> (i32, i32, i32) {
    %c0_i32 = arith.constant 0 : i32
    %c0_i32_0 = arith.constant 0 : i32
    %c0_i32_1 = arith.constant 0 : i32
    return %arg0, %c0_i32, %c0_i32_0 : i32, i32, i32
  }
  func.func @transform_6(%arg0: i32) -> (i32, i32, i32) {
    %c0_i32 = arith.constant 0 : i32
    %c0_i32_0 = arith.constant 0 : i32
    %c0_i32_1 = arith.constant 0 : i32
    return %arg0, %c0_i32, %c0_i32_0 : i32, i32, i32
  }
  func.func @transform_7(%arg0: i32) -> (i32, i32, i32) {
    %c0_i32 = arith.constant 0 : i32
    %c0_i32_0 = arith.constant 0 : i32
    %c0_i32_1 = arith.constant 0 : i32
    return %arg0, %c0_i32, %c0_i32_0 : i32, i32, i32
  }
}

</mosaic_0001>

<llo_original>
// kernel: resnet18_heads_forward.1
$region0: #{resnet18_heads_forward.1}
  #allocation0 [shape = 'u32[]', space=smem, size = 0x4, offset = 0x4, fixed_abs, tag = 'smem constant byte address 0x4 - core index']
  #allocation1 [shape = 'u32[72,128]{1,0:T(1,128)}', space=vmem, size = 0x9000, scoped, tag = 'internal scratch']
  %s0 = inlined_call_operand.vmem [shape: f32[2,1024], index: 0, kind: input, shape index: {}]
  %s1 = inlined_call_operand.hbm [shape: f32[5,1024,256], index: 1, kind: input, shape index: {}]
  %s2 = inlined_call_operand.hbm [shape: f32[5,1,256], index: 2, kind: input, shape index: {}]
  %s3 = inlined_call_operand.hbm [shape: f32[5,256,128], index: 3, kind: input, shape index: {}]
  %s4 = inlined_call_operand.hbm [shape: f32[5,1,128], index: 4, kind: input, shape index: {}]
  %s5 = inlined_call_operand.hbm [shape: f32[5,128,128], index: 5, kind: input, shape index: {}]
  %s6 = inlined_call_operand.hbm [shape: f32[5,1,128], index: 6, kind: input, shape index: {}]
  %s7 = inlined_call_operand.vmem [shape: f32[5,2,128], index: 7, kind: output, shape index: {}]
  %s8 = sld [smem:[#allocation0]]
  $region85: #{resnet18_heads_forward.1} parent=0
    _
  %s10 = ssub.s32 1, %s8
  %s11 = scalar_select 0, %s10, %s8
  $region1: #{resnet18_heads_forward.1} parent=0
    #allocation2 [shape = 'u8[2097152]{0}', space=vmem, size = 0x200000, scoped, tag = 'input window, operand 1']
    #allocation3 [shape = 's32[2]{0}', space=sflag, size = 0x8, scoped, tag = 'scoped memory for resnet18_heads_forward.1']
    #allocation4 [shape = 'u8[2048]{0}', space=vmem, size = 0x800, scoped, tag = 'input window, operand 2']
    #allocation5 [shape = 's32[2]{0}', space=sflag, size = 0x8, scoped, tag = 'scoped memory for resnet18_heads_forward.1']
    #allocation6 [shape = 'u8[262144]{0}', space=vmem, size = 0x40000, scoped, tag = 'input window, operand 3']
    #allocation7 [shape = 'u8[1024]{0}', space=vmem, size = 0x400, scoped, tag = 'input window, operand 4']
    #allocation8 [shape = 's32[2]{0}', space=sflag, size = 0x8, scoped, tag = 'scoped memory for resnet18_heads_forward.1']
    #allocation9 [shape = 'u8[131072]{0}', space=vmem, size = 0x20000, scoped, tag = 'input window, operand 5']
    #allocation10 [shape = 'u8[1024]{0}', space=vmem, size = 0x400, scoped, tag = 'input window, operand 6']
    #allocation11 [shape = 's32[2]{0}', space=sflag, size = 0x8, scoped, tag = 'scoped memory for resnet18_heads_forward.1']
    %12 = vsyncpa [#allocation3], 0
    %s13 = scalar_lea.sflag [#allocation3], 1
    %14 = vsyncpa %s13, 0
    %15 = vsyncpa [#allocation5], 0
    %s16 = scalar_lea.sflag [#allocation5], 1
    %17 = vsyncpa %s16, 0
    %18 = vsyncpa [#allocation8], 0
    %s19 = scalar_lea.sflag [#allocation8], 1
    %20 = vsyncpa %s19, 0
    %21 = vsyncpa [#allocation11], 0
    %s22 = scalar_lea.sflag [#allocation11], 1
    %23 = vsyncpa %s22, 0
    loop: start=0, step=1, limit=7
    $region2: #{resnet18_heads_forward.1} parent=1 // loop_pre_header
      _
    $region3: #{resnet18_heads_forward.1} parent=1 // loop_header
      %s25 = sphi 0, %s29
      %p26 = scmp.ge.s32.totalorder %s25, 7
      %s33 = sphi 0, %s33
      %s35 = sphi 0, %s33
      %s36 = sphi 0, %s35
      %s50 = sphi 0, %s36
      %s56 = sphi 0, %s58
      %s59 = sphi 0, %s56
      %s60 = sphi 0, %s59
      %s76 = sphi 0, %s60
      %s82 = sphi 0, %s84
      %s85 = sphi 0, %s82
      %s86 = sphi 0, %s85
      %s102 = sphi 0, %s86
      %s108 = sphi 0, %s110
      %s111 = sphi 0, %s108
      %s112 = sphi 0, %s111
      %s128 = sphi 0, %s112
      %s134 = sphi 0, %s136
      %s137 = sphi 0, %s134
      %s138 = sphi 0, %s137
      %s154 = sphi 0, %s138
      %s160 = sphi 0, %s162
      %s163 = sphi 0, %s160
      %s164 = sphi 0, %s163
      %s180 = sphi 0, %s164
      %s186 = sphi 0, %s188
      %s189 = sphi 0, %s186
      %s190 = sphi 0, %s189
      %s206 = sphi 0, %s190
      %s212 = sphi 0, %s214
      %s215 = sphi 0, %s212
      %s216 = sphi 0, %s215
      %s232 = sphi 0, %s216
    $region4: #{resnet18_heads_forward.1} parent=1 // loop_header_branch
      %28 = sbr.rel (%p26) target = $region8
    $region5: #{resnet18_heads_forward.1} parent=1 // loop_body
      %s30 = ssub.s32 %s25, 1
      %s31 = ssub.s32 %s25, 2
      %s32 = sadd.s32 %s25, 1
      %s34 = sadd.s32 %s33, 1
      %p37 = scmp.eq.s32.totalorder %s25, 4
      %p38 = scmp.ne.s32.totalorder %s33, %s35
      %p39 = scmp.eq.s32.totalorder %s25, 0
      %p40 = por %p38, %p39
      %p41 = scmp.ne.s32.totalorder %s33, %s35
      %p42 = scmp.eq.s32.totalorder %s30, 4
      %p43 = por %p41, %p42
      %p44 = scmp.ne.s32.totalorder %s35, %s36
      %p45 = scmp.eq.s32.totalorder %s30, 0
      %p46 = por %p44, %p45
      %p47 = scmp.ne.s32.totalorder %s35, %s36
      %p48 = scmp.eq.s32.totalorder %s31, 4
      %p49 = por %p47, %p48
      %p51 = scmp.ne.s32.totalorder %s36, %s50
      %p52 = scmp.eq.s32.totalorder %s31, 0
      %p53 = por %p51, %p52
      %s54 = ssub.s32 %s25, %s32
      %p55 = scmp.eq.s32.totalorder %s54, 0
      %s57 = sadd.s32 %s56, 1
      %s58 = scalar_select %p55, %s56, %s57
      %p61 = pneg %p55
      %p62 = scmp.eq.s32.totalorder %s25, 4
      %p63 = por %p61, %p62
      %p64 = scmp.ne.s32.totalorder %s56, %s59
      %p65 = scmp.eq.s32.totalorder %s25, 0
      %p66 = por %p64, %p65
      %p67 = scmp.ne.s32.totalorder %s56, %s59
      %p68 = scmp.eq.s32.totalorder %s30, 4
      %p69 = por %p67, %p68
      %p70 = scmp.ne.s32.totalorder %s59, %s60
      %p71 = scmp.eq.s32.totalorder %s30, 0
      %p72 = por %p70, %p71
      %p73 = scmp.ne.s32.totalorder %s59, %s60
      %p74 = scmp.eq.s32.totalorder %s31, 4
      %p75 = por %p73, %p74
      %p77 = scmp.ne.s32.totalorder %s60, %s76
      %p78 = scmp.eq.s32.totalorder %s31, 0
      %p79 = por %p77, %p78
      %s80 = ssub.s32 %s25, %s32
      %p81 = scmp.eq.s32.totalorder %s80, 0
      %s83 = sadd.s32 %s82, 1
      %s84 = scalar_select %p81, %s82, %s83
      %p87 = pneg %p81
      %p88 = scmp.eq.s32.totalorder %s25, 4
      %p89 = por %p87, %p88
      %p90 = scmp.ne.s32.totalorder %s82, %s85
      %p91 = scmp.eq.s32.totalorder %s25, 0
      %p92 = por %p90, %p91
      %p93 = scmp.ne.s32.totalorder %s82, %s85
      %p94 = scmp.eq.s32.totalorder %s30, 4
      %p95 = por %p93, %p94
      %p96 = scmp.ne.s32.totalorder %s85, %s86
      %p97 = scmp.eq.s32.totalorder %s30, 0
      %p98 = por %p96, %p97
      %p99 = scmp.ne.s32.totalorder %s85, %s86
      %p100 = scmp.eq.s32.totalorder %s31, 4
      %p101 = por %p99, %p100
      %p103 = scmp.ne.s32.totalorder %s86, %s102
      %p104 = scmp.eq.s32.totalorder %s31, 0
      %p105 = por %p103, %p104
      %s106 = ssub.s32 %s25, %s32
      %p107 = scmp.eq.s32.totalorder %s106, 0
      %s109 = sadd.s32 %s108, 1
      %s110 = scalar_select %p107, %s108, %s109
      %p113 = pneg %p107
      %p114 = scmp.eq.s32.totalorder %s25, 4
      %p115 = por %p113, %p114
      %p116 = scmp.ne.s32.totalorder %s108, %s111
      %p117 = scmp.eq.s32.totalorder %s25, 0
      %p118 = por %p116, %p117
      %p119 = scmp.ne.s32.totalorder %s108, %s111
      %p120 = scmp.eq.s32.totalorder %s30, 4
      %p121 = por %p119, %p120
      %p122 = scmp.ne.s32.totalorder %s111, %s112
      %p123 = scmp.eq.s32.totalorder %s30, 0
      %p124 = por %p122, %p123
      %p125 = scmp.ne.s32.totalorder %s111, %s112
      %p126 = scmp.eq.s32.totalorder %s31, 4
      %p127 = por %p125, %p126
      %p129 = scmp.ne.s32.totalorder %s112, %s128
      %p130 = scmp.eq.s32.totalorder %s31, 0
      %p131 = por %p129, %p130
      %s132 = ssub.s32 %s25, %s32
      %p133 = scmp.eq.s32.totalorder %s132, 0
      %s135 = sadd.s32 %s134, 1
      %s136 = scalar_select %p133, %s134, %s135
      %p139 = pneg %p133
      %p140 = scmp.eq.s32.totalorder %s25, 4
      %p141 = por %p139, %p140
      %p142 = scmp.ne.s32.totalorder %s134, %s137
      %p143 = scmp.eq.s32.totalorder %s25, 0
      %p144 = por %p142, %p143
      %p145 = scmp.ne.s32.totalorder %s134, %s137
      %p146 = scmp.eq.s32.totalorder %s30, 4
      %p147 = por %p145, %p146
      %p148 = scmp.ne.s32.totalorder %s137, %s138
      %p149 = scmp.eq.s32.totalorder %s30, 0
      %p150 = por %p148, %p149
      %p151 = scmp.ne.s32.totalorder %s137, %s138
      %p152 = scmp.eq.s32.totalorder %s31, 4
      %p153 = por %p151, %p152
      %p155 = scmp.ne.s32.totalorder %s138, %s154
      %p156 = scmp.eq.s32.totalorder %s31, 0
      %p157 = por %p155, %p156
      %s158 = ssub.s32 %s25, %s32
      %p159 = scmp.eq.s32.totalorder %s158, 0
      %s161 = sadd.s32 %s160, 1
      %s162 = scalar_select %p159, %s160, %s161
      %p165 = pneg %p159
      %p166 = scmp.eq.s32.totalorder %s25, 4
      %p167 = por %p165, %p166
      %p168 = scmp.ne.s32.totalorder %s160, %s163
      %p169 = scmp.eq.s32.totalorder %s25, 0
      %p170 = por %p168, %p169
      %p171 = scmp.ne.s32.totalorder %s160, %s163
      %p172 = scmp.eq.s32.totalorder %s30, 4
      %p173 = por %p171, %p172
      %p174 = scmp.ne.s32.totalorder %s163, %s164
      %p175 = scmp.eq.s32.totalorder %s30, 0
      %p176 = por %p174, %p175
      %p177 = scmp.ne.s32.totalorder %s163, %s164
      %p178 = scmp.eq.s32.totalorder %s31, 4
      %p179 = por %p177, %p178
      %p181 = scmp.ne.s32.totalorder %s164, %s180
      %p182 = scmp.eq.s32.totalorder %s31, 0
      %p183 = por %p181, %p182
      %s184 = ssub.s32 %s25, %s32
      %p185 = scmp.eq.s32.totalorder %s184, 0
      %s187 = sadd.s32 %s186, 1
      %s188 = scalar_select %p185, %s186, %s187
      %p191 = pneg %p185
      %p192 = scmp.eq.s32.totalorder %s25, 4
      %p193 = por %p191, %p192
      %p194 = scmp.ne.s32.totalorder %s186, %s189
      %p195 = scmp.eq.s32.totalorder %s25, 0
      %p196 = por %p194, %p195
      %p197 = scmp.ne.s32.totalorder %s186, %s189
      %p198 = scmp.eq.s32.totalorder %s30, 4
      %p199 = por %p197, %p198
      %p200 = scmp.ne.s32.totalorder %s189, %s190
      %p201 = scmp.eq.s32.totalorder %s30, 0
      %p202 = por %p200, %p201
      %p203 = scmp.ne.s32.totalorder %s189, %s190
      %p204 = scmp.eq.s32.totalorder %s31, 4
      %p205 = por %p203, %p204
      %p207 = scmp.ne.s32.totalorder %s190, %s206
      %p208 = scmp.eq.s32.totalorder %s31, 0
      %p209 = por %p207, %p208
      %s210 = ssub.s32 %s25, %s32
      %p211 = scmp.eq.s32.totalorder %s210, 0
      %s213 = sadd.s32 %s212, 1
      %s214 = scalar_select %p211, %s212, %s213
      %p217 = pneg %p211
      %p218 = scmp.eq.s32.totalorder %s25, 4
      %p219 = por %p217, %p218
      %p220 = scmp.ne.s32.totalorder %s212, %s215
      %p221 = scmp.eq.s32.totalorder %s25, 0
      %p222 = por %p220, %p221
      %p223 = scmp.ne.s32.totalorder %s212, %s215
      %p224 = scmp.eq.s32.totalorder %s30, 4
      %p225 = por %p223, %p224
      %p226 = scmp.ne.s32.totalorder %s215, %s216
      %p227 = scmp.eq.s32.totalorder %s30, 0
      %p228 = por %p226, %p227
      %p229 = scmp.ne.s32.totalorder %s215, %s216
      %p230 = scmp.eq.s32.totalorder %s31, 4
      %p231 = por %p229, %p230
      %p233 = scmp.ne.s32.totalorder %s216, %s232
      %p234 = scmp.eq.s32.totalorder %s31, 0
      %p235 = por %p233, %p234
      %p236 = scmp.le.s32.totalorder 1, %s25
      %p237 = scmp.lt.s32.totalorder %s25, 6
      %p238 = pnand %p236, %p237
      %p239 = pneg %p238
      // Predicated region
      $region9: #{resnet18_heads_forward.1} parent=5 // pred_check
        _
      $region10: #{resnet18_heads_forward.1} parent=5 // pred_check_branch
        %241 = sbr.rel (%p238) target = $region12
      $region11: #{resnet18_heads_forward.1} parent=5 // pred_region
        %s242 = ssub.s32 %s25, 1
        // Predicated region
        $region13: #{resnet18_heads_forward.1} parent=11 // pred_check
          %p243 = pneg %p46
        $region14: #{resnet18_heads_forward.1} parent=11 // pred_check_branch
          %245 = sbr.rel (%p243) target = $region16
        $region15: #{resnet18_heads_forward.1} parent=11 // pred_region
          _
        $region16: #{resnet18_heads_forward.1} parent=11 // pred_fallthru
          _
      $region12: #{resnet18_heads_forward.1} parent=5 // pred_fallthru
        _
      %p246 = scmp.lt.s32.totalorder %s25, 5
      // Predicated region
      $region17: #{resnet18_heads_forward.1} parent=5 // pred_check
        %p247 = pneg %p246
      $region18: #{resnet18_heads_forward.1} parent=5 // pred_check_branch
        %249 = sbr.rel (%p247) target = $region20
      $region19: #{resnet18_heads_forward.1} parent=5 // pred_region
        // Predicated region
        $region21: #{resnet18_heads_forward.1} parent=19 // pred_check
          %p250 = pneg %p66
        $region22: #{resnet18_heads_forward.1} parent=19 // pred_check_branch
          %252 = sbr.rel (%p250) target = $region24
        $region23: #{resnet18_heads_forward.1} parent=19 // pred_region
          %s253 = sand.u32 %s56, 1
          %s254 = scalar_lea.sflag [#allocation3], %s253
          %s255 = sand.u32 %s56, 1
          %s256 = smul.addr %s255, 2048
          %s257 = scalar_lea.vmem [#allocation2], %s256
          %259 = vsyncadd %s254, 0
          %s260 = smul.addr %s25, 256
          %s261 = smul.addr %s260, 8
          %s262 = scalar_lea.hbm %s1, %s261
          %s263 = sshll.u32 %s262, 4
          %s264 = int_to_ptr.hbm [resolvable:$true] %s263
          %s265 = sshll.u32 %s257, 4
          %s266 = int_to_ptr.vmem [resolvable:$true] %s265
          %271 = dma.hbm_to_vmem [thread:$0]  %s264, 32768, %s266, %s254, 256, 256, 16
        $region24: #{resnet18_heads_forward.1} parent=19 // pred_fallthru
          _
        // Predicated region
        $region25: #{resnet18_heads_forward.1} parent=19 // pred_check
          %p272 = pneg %p92
        $region26: #{resnet18_heads_forward.1} parent=19 // pred_check_branch
          %274 = sbr.rel (%p272) target = $region28
        $region27: #{resnet18_heads_forward.1} parent=19 // pred_region
          %s275 = sand.u32 %s25, 1
          %s276 = scalar_lea.sflag [#allocation5], %s275
          %s277 = sand.u32 %s82, 1
          %s278 = smul.addr %s277, 2
          %s279 = scalar_lea.vmem [#allocation4], %s278
          %281 = vsyncadd %s276, 0
          %s282 = smul.addr %s25, 2
          %s283 = scalar_lea.hbm %s2, %s282
          %s285 = sshll.u32 %s283, 4
          %s286 = int_to_ptr.hbm [resolvable:$true] %s285
          %s287 = sshll.u32 %s279, 4
          %s288 = int_to_ptr.vmem [resolvable:$true] %s287
          %290 = dma.hbm_to_vmem [thread:$0]  %s286, 32, %s288, %s276
        $region28: #{resnet18_heads_forward.1} parent=19 // pred_fallthru
          _
        // Predicated region
        $region29: #{resnet18_heads_forward.1} parent=19 // pred_check
          %p291 = pneg %p118
        $region30: #{resnet18_heads_forward.1} parent=19 // pred_check_branch
          %293 = sbr.rel (%p291) target = $region32
        $region31: #{resnet18_heads_forward.1} parent=19 // pred_region
          %s294 = sand.u32 %s25, 1
          %s295 = scalar_lea.sflag [#allocation5], %s294
          %s296 = sand.u32 %s108, 1
          %s297 = smul.addr %s296, 256
          %s298 = scalar_lea.vmem [#allocation6], %s297
          %300 = vsyncadd %s295, 0
          %s301 = smul.addr %s25, 32
          %s302 = smul.addr %s301, 8
          %s303 = scalar_lea.hbm %s3, %s302
          %s304 = sshll.u32 %s303, 4
          %s305 = int_to_ptr.hbm [resolvable:$true] %s304
          %s306 = sshll.u32 %s298, 4
          %s307 = int_to_ptr.vmem [resolvable:$true] %s306
          %312 = dma.hbm_to_vmem [thread:$0]  %s305, 4096, %s307, %s295, 128, 128, 8
        $region32: #{resnet18_heads_forward.1} parent=19 // pred_fallthru
          _
        // Predicated region
        $region33: #{resnet18_heads_forward.1} parent=19 // pred_check
          %p313 = pneg %p144
        $region34: #{resnet18_heads_forward.1} parent=19 // pred_check_branch
          %315 = sbr.rel (%p313) target = $region36
        $region35: #{resnet18_heads_forward.1} parent=19 // pred_region
          %s316 = sand.u32 %s25, 1
          %s317 = scalar_lea.sflag [#allocation8], %s316
          %s318 = sand.u32 %s134, 1
          %s319 = scalar_lea.vmem [#allocation7], %s318
          %321 = vsyncadd %s317, 0
          %s322 = scalar_lea.hbm %s4, %s25
          %s324 = sshll.u32 %s322, 4
          %s325 = int_to_ptr.hbm [resolvable:$true] %s324
          %s326 = sshll.u32 %s319, 4
          %s327 = int_to_ptr.vmem [resolvable:$true] %s326
          %329 = dma.hbm_to_vmem [thread:$0]  %s325, 16, %s327, %s317
        $region36: #{resnet18_heads_forward.1} parent=19 // pred_fallthru
          _
        // Predicated region
        $region37: #{resnet18_heads_forward.1} parent=19 // pred_check
          %p330 = pneg %p170
        $region38: #{resnet18_heads_forward.1} parent=19 // pred_check_branch
          %332 = sbr.rel (%p330) target = $region40
        $region39: #{resnet18_heads_forward.1} parent=19 // pred_region
          %s333 = sand.u32 %s25, 1
          %s334 = scalar_lea.sflag [#allocation8], %s333
          %s335 = sand.u32 %s160, 1
          %s336 = smul.addr %s335, 128
          %s337 = scalar_lea.vmem [#allocation9], %s336
          %339 = vsyncadd %s334, 0
          %s340 = smul.addr %s25, 16
          %s341 = smul.addr %s340, 8
          %s342 = scalar_lea.hbm %s5, %s341
          %s343 = sshll.u32 %s342, 4
          %s344 = int_to_ptr.hbm [resolvable:$true] %s343
          %s345 = sshll.u32 %s337, 4
          %s346 = int_to_ptr.vmem [resolvable:$true] %s345
          %351 = dma.hbm_to_vmem [thread:$0]  %s344, 2048, %s346, %s334, 128, 128, 8
        $region40: #{resnet18_heads_forward.1} parent=19 // pred_fallthru
          _
        // Predicated region
        $region41: #{resnet18_heads_forward.1} parent=19 // pred_check
          %p352 = pneg %p196
        $region42: #{resnet18_heads_forward.1} parent=19 // pred_check_branch
          %354 = sbr.rel (%p352) target = $region44
        $region43: #{resnet18_heads_forward.1} parent=19 // pred_region
          %s355 = sand.u32 %s186, 1
          %s356 = scalar_lea.sflag [#allocation11], %s355
          %s357 = sand.u32 %s186, 1
          %s358 = scalar_lea.vmem [#allocation10], %s357
          %360 = vsyncadd %s356, 0
          %s361 = scalar_lea.hbm %s6, %s25
          %s363 = sshll.u32 %s361, 4
          %s364 = int_to_ptr.hbm [resolvable:$true] %s363
          %s365 = sshll.u32 %s358, 4
          %s366 = int_to_ptr.vmem [resolvable:$true] %s365
          %368 = dma.hbm_to_vmem [thread:$0]  %s364, 16, %s366, %s356
        $region44: #{resnet18_heads_forward.1} parent=19 // pred_fallthru
          _
      $region20: #{resnet18_heads_forward.1} parent=5 // pred_fallthru
        _
      %p369 = scmp.le.s32.totalorder 1, %s25
      %p370 = scmp.lt.s32.totalorder %s25, 6
      %p371 = pnand %p369, %p370
      %p372 = pneg %p371
      // Predicated region
      $region45: #{resnet18_heads_forward.1} parent=5 // pred_check
        _
      $region46: #{resnet18_heads_forward.1} parent=5 // pred_check_branch
        %374 = sbr.rel (%p371) target = $region48
      $region47: #{resnet18_heads_forward.1} parent=5 // pred_region
        %s375 = ssub.s32 %s25, 1
        %s376 = sand.u32 %s59, 1
        %s377 = scalar_lea.sflag [#allocation3], %s376
        %s378 = sand.u32 %s59, 1
        %s379 = smul.addr %s378, 2048
        %s380 = scalar_lea.vmem [#allocation2], %s379
        // Predicated region
        $region49: #{resnet18_heads_forward.1} parent=47 // pred_check
          %p381 = pneg %p72
        $region50: #{resnet18_heads_forward.1} parent=47 // pred_check_branch
          %383 = sbr.rel (%p381) target = $region52
        $region51: #{resnet18_heads_forward.1} parent=47 // pred_region
          %385 = dma.done %s377, 32768
        $region52: #{resnet18_heads_forward.1} parent=47 // pred_fallthru
          _
        %s386 = sand.u32 %s30, 1
        %s387 = scalar_lea.sflag [#allocation5], %s386
        %s388 = sand.u32 %s85, 1
        %s389 = smul.addr %s388, 2
        %s390 = scalar_lea.vmem [#allocation4], %s389
        // Predicated region
        $region53: #{resnet18_heads_forward.1} parent=47 // pred_check
          %p391 = pneg %p98
        $region54: #{resnet18_heads_forward.1} parent=47 // pred_check_branch
          %393 = sbr.rel (%p391) target = $region56
        $region55: #{resnet18_heads_forward.1} parent=47 // pred_region
          %395 = dma.done %s387, 32
        $region56: #{resnet18_heads_forward.1} parent=47 // pred_fallthru
          _
        %s396 = sand.u32 %s30, 1
        %s397 = scalar_lea.sflag [#allocation5], %s396
        %s398 = sand.u32 %s111, 1
        %s399 = smul.addr %s398, 256
        %s400 = scalar_lea.vmem [#allocation6], %s399
        // Predicated region
        $region57: #{resnet18_heads_forward.1} parent=47 // pred_check
          %p401 = pneg %p124
        $region58: #{resnet18_heads_forward.1} parent=47 // pred_check_branch
          %403 = sbr.rel (%p401) target = $region60
        $region59: #{resnet18_heads_forward.1} parent=47 // pred_region
          %405 = dma.done %s397, 4096
        $region60: #{resnet18_heads_forward.1} parent=47 // pred_fallthru
          _
        %s406 = sand.u32 %s30, 1
        %s407 = scalar_lea.sflag [#allocation8], %s406
        %s408 = sand.u32 %s137, 1
        %s409 = scalar_lea.vmem [#allocation7], %s408
        // Predicated region
        $region61: #{resnet18_heads_forward.1} parent=47 // pred_check
          %p410 = pneg %p150
        $region62: #{resnet18_heads_forward.1} parent=47 // pred_check_branch
          %412 = sbr.rel (%p410) target = $region64
        $region63: #{resnet18_heads_forward.1} parent=47 // pred_region
          %414 = dma.done %s407, 16
        $region64: #{resnet18_heads_forward.1} parent=47 // pred_fallthru
          _
        %s415 = sand.u32 %s30, 1
        %s416 = scalar_lea.sflag [#allocation8], %s415
        %s417 = sand.u32 %s163, 1
        %s418 = smul.addr %s417, 128
        %s419 = scalar_lea.vmem [#allocation9], %s418
        // Predicated region
        $region65: #{resnet18_heads_forward.1} parent=47 // pred_check
          %p420 = pneg %p176
        $region66: #{resnet18_heads_forward.1} parent=47 // pred_check_branch
          %422 = sbr.rel (%p420) target = $region68
        $region67: #{resnet18_heads_forward.1} parent=47 // pred_region
          %424 = dma.done %s416, 2048
        $region68: #{resnet18_heads_forward.1} parent=47 // pred_fallthru
          _
        %s425 = sand.u32 %s189, 1
        %s426 = scalar_lea.sflag [#allocation11], %s425
        %s427 = sand.u32 %s189, 1
        %s428 = scalar_lea.vmem [#allocation10], %s427
        // Predicated region
        $region69: #{resnet18_heads_forward.1} parent=47 // pred_check
          %p429 = pneg %p202
        $region70: #{resnet18_heads_forward.1} parent=47 // pred_check_branch
          %431 = sbr.rel (%p429) target = $region72
        $region71: #{resnet18_heads_forward.1} parent=47 // pred_region
          %433 = dma.done %s426, 16
        $region72: #{resnet18_heads_forward.1} parent=47 // pred_fallthru
          _
        %p434 = pneg %p46
        %p435 = pneg %p43
        %s436 = sand.u32 %s59, 1
        %s437 = scalar_lea.sflag [#allocation3], %s436
        %s438 = sand.u32 %s59, 1
        %s439 = smul.addr %s438, 2048
        %s440 = scalar_lea.vmem [#allocation2], %s439
        %p441 = pneg %p72
        %p442 = pneg %p69
        %s443 = sand.u32 %s30, 1
        %s444 = scalar_lea.sflag [#allocation5], %s443
        %s445 = sand.u32 %s85, 1
        %s446 = smul.addr %s445, 2
        %s447 = scalar_lea.vmem [#allocation4], %s446
        %p448 = pneg %p98
        %p449 = pneg %p95
        %s450 = sand.u32 %s30, 1
        %s451 = scalar_lea.sflag [#allocation5], %s450
        %s452 = sand.u32 %s111, 1
        %s453 = smul.addr %s452, 256
        %s454 = scalar_lea.vmem [#allocation6], %s453
        %p455 = pneg %p124
        %p456 = pneg %p121
        %s457 = sand.u32 %s30, 1
        %s458 = scalar_lea.sflag [#allocation8], %s457
        %s459 = sand.u32 %s137, 1
        %s460 = scalar_lea.vmem [#allocation7], %s459
        %p461 = pneg %p150
        %p462 = pneg %p147
        %s463 = sand.u32 %s30, 1
        %s464 = scalar_lea.sflag [#allocation8], %s463
        %s465 = sand.u32 %s163, 1
        %s466 = smul.addr %s465, 128
        %s467 = scalar_lea.vmem [#allocation9], %s466
        %p468 = pneg %p176
        %p469 = pneg %p173
        %s470 = sand.u32 %s189, 1
        %s471 = scalar_lea.sflag [#allocation11], %s470
        %s472 = sand.u32 %s189, 1
        %s473 = scalar_lea.vmem [#allocation10], %s472
        %p474 = pneg %p202
        %p475 = pneg %p199
        %p476 = pneg %p228
        %p477 = pneg %p225
        %p478 = scmp.lt.s32.totalorder %s30, 4
        %s479 = scalar_select %p478, %s30, 4
        %s480 = smul.addr %s479, 2
        %s481 = scalar_lea.vmem %s7, %s480
        %p482 = scmp.lt.s32.totalorder %s30, 4
        %s483 = scalar_select %p482, %s30, 4
        %s484 = smul.addr %s483, 2
        %s485 = scalar_lea.vmem %s7, %s484
        %v486 = vld [vmem:[%s0] sm:$0xff]
        %v487 = vld [vmem:[%s0 + $0x8] sm:$0xff]
        %v488 = vld [vmem:[%s380] sm:$0xff]
        %v489 = vld [vmem:[%s380 + $0x8] sm:$0xff]
        %v490 = vld [vmem:[%s380 + $0x10] sm:$0xff]
        %v491 = vld [vmem:[%s380 + $0x18] sm:$0xff]
        %v492 = vld [vmem:[%s380 + $0x20] sm:$0xff]
        %v493 = vld [vmem:[%s380 + $0x28] sm:$0xff]
        %v494 = vld [vmem:[%s380 + $0x30] sm:$0xff]
        %v495 = vld [vmem:[%s380 + $0x38] sm:$0xff]
        %v496 = vld [vmem:[%s380 + $0x40] sm:$0xff]
        %v497 = vld [vmem:[%s380 + $0x48] sm:$0xff]
        %v498 = vld [vmem:[%s380 + $0x50] sm:$0xff]
        %v499 = vld [vmem:[%s380 + $0x58] sm:$0xff]
        %v500 = vld [vmem:[%s380 + $0x60] sm:$0xff]
        %v501 = vld [vmem:[%s380 + $0x68] sm:$0xff]
        %v502 = vld [vmem:[%s380 + $0x70] sm:$0xff]
        %v503 = vld [vmem:[%s380 + $0x78] sm:$0xff]
        %v504 = vld [vmem:[%s380 + $0x80] sm:$0xff]
        %v505 = vld [vmem:[%s380 + $0x88] sm:$0xff]
        %v506 = vld [vmem:[%s380 + $0x90] sm:$0xff]
        %v507 = vld [vmem:[%s380 + $0x98] sm:$0xff]
        %v508 = vld [vmem:[%s380 + $0xa0] sm:$0xff]
        %v509 = vld [vmem:[%s380 + $0xa8] sm:$0xff]
        %v510 = vld [vmem:[%s380 + $0xb0] sm:$0xff]
        %v511 = vld [vmem:[%s380 + $0xb8] sm:$0xff]
        %v512 = vld [vmem:[%s380 + $0xc0] sm:$0xff]
        %v513 = vld [vmem:[%s380 + $0xc8] sm:$0xff]
        %v514 = vld [vmem:[%s380 + $0xd0] sm:$0xff]
        %v515 = vld [vmem:[%s380 + $0xd8] sm:$0xff]
        %v516 = vld [vmem:[%s380 + $0xe0] sm:$0xff]
        %v517 = vld [vmem:[%s380 + $0xe8] sm:$0xff]
        %v518 = vld [vmem:[%s380 + $0xf0] sm:$0xff]
        %v519 = vld [vmem:[%s380 + $0xf8] sm:$0xff]
        %v520 = vld [vmem:[%s380 + $0x100] sm:$0xff]
        %v521 = vld [vmem:[%s380 + $0x108] sm:$0xff]
        %v522 = vld [vmem:[%s380 + $0x110] sm:$0xff]
        %v523 = vld [vmem:[%s380 + $0x118] sm:$0xff]
        %v524 = vld [vmem:[%s380 + $0x120] sm:$0xff]
        %v525 = vld [vmem:[%s380 + $0x128] sm:$0xff]
        %v526 = vld [vmem:[%s380 + $0x130] sm:$0xff]
        %v527 = vld [vmem:[%s380 + $0x138] sm:$0xff]
        %v528 = vld [vmem:[%s380 + $0x140] sm:$0xff]
        %v529 = vld [vmem:[%s380 + $0x148] sm:$0xff]
        %v530 = vld [vmem:[%s380 + $0x150] sm:$0xff]
        %v531 = vld [vmem:[%s380 + $0x158] sm:$0xff]
        %v532 = vld [vmem:[%s380 + $0x160] sm:$0xff]
        %v533 = vld [vmem:[%s380 + $0x168] sm:$0xff]
        %v534 = vld [vmem:[%s380 + $0x170] sm:$0xff]
        %v535 = vld [vmem:[%s380 + $0x178] sm:$0xff]
        %v536 = vld [vmem:[%s380 + $0x180] sm:$0xff]
        %v537 = vld [vmem:[%s380 + $0x188] sm:$0xff]
        %v538 = vld [vmem:[%s380 + $0x190] sm:$0xff]
        %v539 = vld [vmem:[%s380 + $0x198] sm:$0xff]
        %v540 = vld [vmem:[%s380 + $0x1a0] sm:$0xff]
        %v541 = vld [vmem:[%s380 + $0x1a8] sm:$0xff]
        %v542 = vld [vmem:[%s380 + $0x1b0] sm:$0xff]
        %v543 = vld [vmem:[%s380 + $0x1b8] sm:$0xff]
        %v544 = vld [vmem:[%s380 + $0x1c0] sm:$0xff]
        %v545 = vld [vmem:[%s380 + $0x1c8] sm:$0xff]
        %v546 = vld [vmem:[%s380 + $0x1d0] sm:$0xff]
        %v547 = vld [vmem:[%s380 + $0x1d8] sm:$0xff]
        %v548 = vld [vmem:[%s380 + $0x1e0] sm:$0xff]
        %v549 = vld [vmem:[%s380 + $0x1e8] sm:$0xff]
        %v550 = vld [vmem:[%s380 + $0x1f0] sm:$0xff]
        %v551 = vld [vmem:[%s380 + $0x1f8] sm:$0xff]
        %v552 = vld [vmem:[%s380 + $0x200] sm:$0xff]
        %v553 = vld [vmem:[%s380 + $0x208] sm:$0xff]
        %v554 = vld [vmem:[%s380 + $0x210] sm:$0xff]
        %v555 = vld [vmem:[%s380 + $0x218] sm:$0xff]
        %v556 = vld [vmem:[%s380 + $0x220] sm:$0xff]
        %v557 = vld [vmem:[%s380 + $0x228] sm:$0xff]
        %v558 = vld [vmem:[%s380 + $0x230] sm:$0xff]
        %v559 = vld [vmem:[%s380 + $0x238] sm:$0xff]
        %v560 = vld [vmem:[%s380 + $0x240] sm:$0xff]
        %v561 = vld [vmem:[%s380 + $0x248] sm:$0xff]
        %v562 = vld [vmem:[%s380 + $0x250] sm:$0xff]
        %v563 = vld [vmem:[%s380 + $0x258] sm:$0xff]
        %v564 = vld [vmem:[%s380 + $0x260] sm:$0xff]
        %v565 = vld [vmem:[%s380 + $0x268] sm:$0xff]
        %v566 = vld [vmem:[%s380 + $0x270] sm:$0xff]
        %v567 = vld [vmem:[%s380 + $0x278] sm:$0xff]
        %v568 = vld [vmem:[%s380 + $0x280] sm:$0xff]
        %v569 = vld [vmem:[%s380 + $0x288] sm:$0xff]
        %v570 = vld [vmem:[%s380 + $0x290] sm:$0xff]
        %v571 = vld [vmem:[%s380 + $0x298] sm:$0xff]
        %v572 = vld [vmem:[%s380 + $0x2a0] sm:$0xff]
        %v573 = vld [vmem:[%s380 + $0x2a8] sm:$0xff]
        %v574 = vld [vmem:[%s380 + $0x2b0] sm:$0xff]
        %v575 = vld [vmem:[%s380 + $0x2b8] sm:$0xff]
        %v576 = vld [vmem:[%s380 + $0x2c0] sm:$0xff]
        %v577 = vld [vmem:[%s380 + $0x2c8] sm:$0xff]
        %v578 = vld [vmem:[%s380 + $0x2d0] sm:$0xff]
        %v579 = vld [vmem:[%s380 + $0x2d8] sm:$0xff]
        %v580 = vld [vmem:[%s380 + $0x2e0] sm:$0xff]
        %v581 = vld [vmem:[%s380 + $0x2e8] sm:$0xff]
        %v582 = vld [vmem:[%s380 + $0x2f0] sm:$0xff]
        %v583 = vld [vmem:[%s380 + $0x2f8] sm:$0xff]
        %v584 = vld [vmem:[%s380 + $0x300] sm:$0xff]
        %v585 = vld [vmem:[%s380 + $0x308] sm:$0xff]
        %v586 = vld [vmem:[%s380 + $0x310] sm:$0xff]
        %v587 = vld [vmem:[%s380 + $0x318] sm:$0xff]
        %v588 = vld [vmem:[%s380 + $0x320] sm:$0xff]
        %v589 = vld [vmem:[%s380 + $0x328] sm:$0xff]
        %v590 = vld [vmem:[%s380 + $0x330] sm:$0xff]
        %v591 = vld [vmem:[%s380 + $0x338] sm:$0xff]
        %v592 = vld [vmem:[%s380 + $0x340] sm:$0xff]
        %v593 = vld [vmem:[%s380 + $0x348] sm:$0xff]
        %v594 = vld [vmem:[%s380 + $0x350] sm:$0xff]
        %v595 = vld [vmem:[%s380 + $0x358] sm:$0xff]
        %v596 = vld [vmem:[%s380 + $0x360] sm:$0xff]
        %v597 = vld [vmem:[%s380 + $0x368] sm:$0xff]
        %v598 = vld [vmem:[%s380 + $0x370] sm:$0xff]
        %v599 = vld [vmem:[%s380 + $0x378] sm:$0xff]
        %v600 = vld [vmem:[%s380 + $0x380] sm:$0xff]
        %v601 = vld [vmem:[%s380 + $0x388] sm:$0xff]
        %v602 = vld [vmem:[%s380 + $0x390] sm:$0xff]
        %v603 = vld [vmem:[%s380 + $0x398] sm:$0xff]
        %v604 = vld [vmem:[%s380 + $0x3a0] sm:$0xff]
        %v605 = vld [vmem:[%s380 + $0x3a8] sm:$0xff]
        %v606 = vld [vmem:[%s380 + $0x3b0] sm:$0xff]
        %v607 = vld [vmem:[%s380 + $0x3b8] sm:$0xff]
        %v608 = vld [vmem:[%s380 + $0x3c0] sm:$0xff]
        %v609 = vld [vmem:[%s380 + $0x3c8] sm:$0xff]
        %v610 = vld [vmem:[%s380 + $0x3d0] sm:$0xff]
        %v611 = vld [vmem:[%s380 + $0x3d8] sm:$0xff]
        %v612 = vld [vmem:[%s380 + $0x3e0] sm:$0xff]
        %v613 = vld [vmem:[%s380 + $0x3e8] sm:$0xff]
        %v614 = vld [vmem:[%s380 + $0x3f0] sm:$0xff]
        %v615 = vld [vmem:[%s380 + $0x3f8] sm:$0xff]
        %v616 = vld [vmem:[%s380 + $0x400] sm:$0xff]
        %v617 = vld [vmem:[%s380 + $0x408] sm:$0xff]
        %v618 = vld [vmem:[%s380 + $0x410] sm:$0xff]
        %v619 = vld [vmem:[%s380 + $0x418] sm:$0xff]
        %v620 = vld [vmem:[%s380 + $0x420] sm:$0xff]
        %v621 = vld [vmem:[%s380 + $0x428] sm:$0xff]
        %v622 = vld [vmem:[%s380 + $0x430] sm:$0xff]
        %v623 = vld [vmem:[%s380 + $0x438] sm:$0xff]
        %v624 = vld [vmem:[%s380 + $0x440] sm:$0xff]
        %v625 = vld [vmem:[%s380 + $0x448] sm:$0xff]
        %v626 = vld [vmem:[%s380 + $0x450] sm:$0xff]
        %v627 = vld [vmem:[%s380 + $0x458] sm:$0xff]
        %v628 = vld [vmem:[%s380 + $0x460] sm:$0xff]
        %v629 = vld [vmem:[%s380 + $0x468] sm:$0xff]
        %v630 = vld [vmem:[%s380 + $0x470] sm:$0xff]
        %v631 = vld [vmem:[%s380 + $0x478] sm:$0xff]
        %v632 = vld [vmem:[%s380 + $0x480] sm:$0xff]
        %v633 = vld [vmem:[%s380 + $0x488] sm:$0xff]
        %v634 = vld [vmem:[%s380 + $0x490] sm:$0xff]
        %v635 = vld [vmem:[%s380 + $0x498] sm:$0xff]
        %v636 = vld [vmem:[%s380 + $0x4a0] sm:$0xff]
        %v637 = vld [vmem:[%s380 + $0x4a8] sm:$0xff]
        %v638 = vld [vmem:[%s380 + $0x4b0] sm:$0xff]
        %v639 = vld [vmem:[%s380 + $0x4b8] sm:$0xff]
        %v640 = vld [vmem:[%s380 + $0x4c0] sm:$0xff]
        %v641 = vld [vmem:[%s380 + $0x4c8] sm:$0xff]
        %v642 = vld [vmem:[%s380 + $0x4d0] sm:$0xff]
        %v643 = vld [vmem:[%s380 + $0x4d8] sm:$0xff]
        %v644 = vld [vmem:[%s380 + $0x4e0] sm:$0xff]
        %v645 = vld [vmem:[%s380 + $0x4e8] sm:$0xff]
        %v646 = vld [vmem:[%s380 + $0x4f0] sm:$0xff]
        %v647 = vld [vmem:[%s380 + $0x4f8] sm:$0xff]
        %v648 = vld [vmem:[%s380 + $0x500] sm:$0xff]
        %v649 = vld [vmem:[%s380 + $0x508] sm:$0xff]
        %v650 = vld [vmem:[%s380 + $0x510] sm:$0xff]
        %v651 = vld [vmem:[%s380 + $0x518] sm:$0xff]
        %v652 = vld [vmem:[%s380 + $0x520] sm:$0xff]
        %v653 = vld [vmem:[%s380 + $0x528] sm:$0xff]
        %v654 = vld [vmem:[%s380 + $0x530] sm:$0xff]
        %v655 = vld [vmem:[%s380 + $0x538] sm:$0xff]
        %v656 = vld [vmem:[%s380 + $0x540] sm:$0xff]
        %v657 = vld [vmem:[%s380 + $0x548] sm:$0xff]
        %v658 = vld [vmem:[%s380 + $0x550] sm:$0xff]
        %v659 = vld [vmem:[%s380 + $0x558] sm:$0xff]
        %v660 = vld [vmem:[%s380 + $0x560] sm:$0xff]
        %v661 = vld [vmem:[%s380 + $0x568] sm:$0xff]
        %v662 = vld [vmem:[%s380 + $0x570] sm:$0xff]
        %v663 = vld [vmem:[%s380 + $0x578] sm:$0xff]
        %v664 = vld [vmem:[%s380 + $0x580] sm:$0xff]
        %v665 = vld [vmem:[%s380 + $0x588] sm:$0xff]
        %v666 = vld [vmem:[%s380 + $0x590] sm:$0xff]
        %v667 = vld [vmem:[%s380 + $0x598] sm:$0xff]
        %v668 = vld [vmem:[%s380 + $0x5a0] sm:$0xff]
        %v669 = vld [vmem:[%s380 + $0x5a8] sm:$0xff]
        %v670 = vld [vmem:[%s380 + $0x5b0] sm:$0xff]
        %v671 = vld [vmem:[%s380 + $0x5b8] sm:$0xff]
        %v672 = vld [vmem:[%s380 + $0x5c0] sm:$0xff]
        %v673 = vld [vmem:[%s380 + $0x5c8] sm:$0xff]
        %v674 = vld [vmem:[%s380 + $0x5d0] sm:$0xff]
        %v675 = vld [vmem:[%s380 + $0x5d8] sm:$0xff]
        %v676 = vld [vmem:[%s380 + $0x5e0] sm:$0xff]
        %v677 = vld [vmem:[%s380 + $0x5e8] sm:$0xff]
        %v678 = vld [vmem:[%s380 + $0x5f0] sm:$0xff]
        %v679 = vld [vmem:[%s380 + $0x5f8] sm:$0xff]
        %v680 = vld [vmem:[%s380 + $0x600] sm:$0xff]
        %v681 = vld [vmem:[%s380 + $0x608] sm:$0xff]
        %v682 = vld [vmem:[%s380 + $0x610] sm:$0xff]
        %v683 = vld [vmem:[%s380 + $0x618] sm:$0xff]
        %v684 = vld [vmem:[%s380 + $0x620] sm:$0xff]
        %v685 = vld [vmem:[%s380 + $0x628] sm:$0xff]
        %v686 = vld [vmem:[%s380 + $0x630] sm:$0xff]
        %v687 = vld [vmem:[%s380 + $0x638] sm:$0xff]
        %v688 = vld [vmem:[%s380 + $0x640] sm:$0xff]
        %v689 = vld [vmem:[%s380 + $0x648] sm:$0xff]
        %v690 = vld [vmem:[%s380 + $0x650] sm:$0xff]
        %v691 = vld [vmem:[%s380 + $0x658] sm:$0xff]
        %v692 = vld [vmem:[%s380 + $0x660] sm:$0xff]
        %v693 = vld [vmem:[%s380 + $0x668] sm:$0xff]
        %v694 = vld [vmem:[%s380 + $0x670] sm:$0xff]
        %v695 = vld [vmem:[%s380 + $0x678] sm:$0xff]
        %v696 = vld [vmem:[%s380 + $0x680] sm:$0xff]
        %v697 = vld [vmem:[%s380 + $0x688] sm:$0xff]
        %v698 = vld [vmem:[%s380 + $0x690] sm:$0xff]
        %v699 = vld [vmem:[%s380 + $0x698] sm:$0xff]
        %v700 = vld [vmem:[%s380 + $0x6a0] sm:$0xff]
        %v701 = vld [vmem:[%s380 + $0x6a8] sm:$0xff]
        %v702 = vld [vmem:[%s380 + $0x6b0] sm:$0xff]
        %v703 = vld [vmem:[%s380 + $0x6b8] sm:$0xff]
        %v704 = vld [vmem:[%s380 + $0x6c0] sm:$0xff]
        %v705 = vld [vmem:[%s380 + $0x6c8] sm:$0xff]
        %v706 = vld [vmem:[%s380 + $0x6d0] sm:$0xff]
        %v707 = vld [vmem:[%s380 + $0x6d8] sm:$0xff]
        %v708 = vld [vmem:[%s380 + $0x6e0] sm:$0xff]
        %v709 = vld [vmem:[%s380 + $0x6e8] sm:$0xff]
        %v710 = vld [vmem:[%s380 + $0x6f0] sm:$0xff]
        %v711 = vld [vmem:[%s380 + $0x6f8] sm:$0xff]
        %v712 = vld [vmem:[%s380 + $0x700] sm:$0xff]
        %v713 = vld [vmem:[%s380 + $0x708] sm:$0xff]
        %v714 = vld [vmem:[%s380 + $0x710] sm:$0xff]
        %v715 = vld [vmem:[%s380 + $0x718] sm:$0xff]
        %v716 = vld [vmem:[%s380 + $0x720] sm:$0xff]
        %v717 = vld [vmem:[%s380 + $0x728] sm:$0xff]
        %v718 = vld [vmem:[%s380 + $0x730] sm:$0xff]
        %v719 = vld [vmem:[%s380 + $0x738] sm:$0xff]
        %v720 = vld [vmem:[%s380 + $0x740] sm:$0xff]
        %v721 = vld [vmem:[%s380 + $0x748] sm:$0xff]
        %v722 = vld [vmem:[%s380 + $0x750] sm:$0xff]
        %v723 = vld [vmem:[%s380 + $0x758] sm:$0xff]
        %v724 = vld [vmem:[%s380 + $0x760] sm:$0xff]
        %v725 = vld [vmem:[%s380 + $0x768] sm:$0xff]
        %v726 = vld [vmem:[%s380 + $0x770] sm:$0xff]
        %v727 = vld [vmem:[%s380 + $0x778] sm:$0xff]
        %v728 = vld [vmem:[%s380 + $0x780] sm:$0xff]
        %v729 = vld [vmem:[%s380 + $0x788] sm:$0xff]
        %v730 = vld [vmem:[%s380 + $0x790] sm:$0xff]
        %v731 = vld [vmem:[%s380 + $0x798] sm:$0xff]
        %v732 = vld [vmem:[%s380 + $0x7a0] sm:$0xff]
        %v733 = vld [vmem:[%s380 + $0x7a8] sm:$0xff]
        %v734 = vld [vmem:[%s380 + $0x7b0] sm:$0xff]
        %v735 = vld [vmem:[%s380 + $0x7b8] sm:$0xff]
        %v736 = vld [vmem:[%s380 + $0x7c0] sm:$0xff]
        %v737 = vld [vmem:[%s380 + $0x7c8] sm:$0xff]
        %v738 = vld [vmem:[%s380 + $0x7d0] sm:$0xff]
        %v739 = vld [vmem:[%s380 + $0x7d8] sm:$0xff]
        %v740 = vld [vmem:[%s380 + $0x7e0] sm:$0xff]
        %v741 = vld [vmem:[%s380 + $0x7e8] sm:$0xff]
        %v742 = vld [vmem:[%s380 + $0x7f0] sm:$0xff]
        %v743 = vld [vmem:[%s380 + $0x7f8] sm:$0xff]
        %v744 = vld [vmem:[%s390] sm:$0x3]
        %v746 = vperm.slane %v744, 0
        %v747 = vperm.slane %v744, 1
        %752 = vst [vmem:[#allocation1] ss:$4 sm:$0xff] %v486
        %s753 = scalar_lea.vmem [#allocation1], 32
        %754 = vst [vmem:[%s753] ss:$4 sm:$0xff] %v487
        %v755 = vld.sshfl [vmem:[#allocation1] sm:$0xff pattern:$0x73625140]
        %v756 = vld.sshfl [vmem:[#allocation1 + $0x8] sm:$0xff pattern:$0x73625140]
        %v757 = vld.sshfl [vmem:[#allocation1 + $0x10] sm:$0xff pattern:$0x73625140]
        %v758 = vld.sshfl [vmem:[#allocation1 + $0x18] sm:$0xff pattern:$0x73625140]
        %v759 = vld.sshfl [vmem:[#allocation1 + $0x20] sm:$0xff pattern:$0x73625140]
        %v760 = vld.sshfl [vmem:[#allocation1 + $0x28] sm:$0xff pattern:$0x73625140]
        %v761 = vld.sshfl [vmem:[#allocation1 + $0x30] sm:$0xff pattern:$0x73625140]
        %v762 = vld.sshfl [vmem:[#allocation1 + $0x38] sm:$0xff pattern:$0x73625140]
        %771 = vmatpush.msra.mxu0 %v518
        %772 = vmatpush.msra.mxu0 %v516
        %773 = vmatpush.msra.mxu0 %v514
        %774 = vmatpush.msra.mxu0 %v512
        %775 = vmatpush.msra.mxu0 %v510
        %776 = vmatpush.msra.mxu0 %v508
        %777 = vmatpush.msra.mxu0 %v506
        %778 = vmatpush.msra.mxu0 %v504
        %779 = vmatpush.msra.mxu0 %v502
        %780 = vmatpush.msra.mxu0 %v500
        %781 = vmatpush.msra.mxu0 %v498
        %782 = vmatpush.msra.mxu0 %v496
        %783 = vmatpush.msra.mxu0 %v494
        %784 = vmatpush.msra.mxu0 %v492
        %785 = vmatpush.msra.mxu0 %v490
        %786 = vmatpush.msra.mxu0 %v488
        %787 = vmatmul.f32.gmra.mxu0 %v755
        %v788 = vpop.f32.mrf.mxu0
        %v789 = vadd.f32 %v746, %v788
        %790 = vdwg.mxu0
        %791 = vmatpush.msra.mxu0 %v550
        %792 = vmatpush.msra.mxu0 %v548
        %793 = vmatpush.msra.mxu0 %v546
        %794 = vmatpush.msra.mxu0 %v544
        %795 = vmatpush.msra.mxu0 %v542
        %796 = vmatpush.msra.mxu0 %v540
        %797 = vmatpush.msra.mxu0 %v538
        %798 = vmatpush.msra.mxu0 %v536
        %799 = vmatpush.msra.mxu0 %v534
        %800 = vmatpush.msra.mxu0 %v532
        %801 = vmatpush.msra.mxu0 %v530
        %802 = vmatpush.msra.mxu0 %v528
        %803 = vmatpush.msra.mxu0 %v526
        %804 = vmatpush.msra.mxu0 %v524
        %805 = vmatpush.msra.mxu0 %v522
        %806 = vmatpush.msra.mxu0 %v520
        %807 = vmatmul.f32.gmra.mxu0 %v756
        %v808 = vpop.f32.mrf.mxu0
        %v809 = vadd.f32 %v789, %v808
        %810 = vdwg.mxu0
        %811 = vmatpush.msra.mxu0 %v582
        %812 = vmatpush.msra.mxu0 %v580
        %813 = vmatpush.msra.mxu0 %v578
        %814 = vmatpush.msra.mxu0 %v576
        %815 = vmatpush.msra.mxu0 %v574
        %816 = vmatpush.msra.mxu0 %v572
        %817 = vmatpush.msra.mxu0 %v570
        %818 = vmatpush.msra.mxu0 %v568
        %819 = vmatpush.msra.mxu0 %v566
        %820 = vmatpush.msra.mxu0 %v564
        %821 = vmatpush.msra.mxu0 %v562
        %822 = vmatpush.msra.mxu0 %v560
        %823 = vmatpush.msra.mxu0 %v558
        %824 = vmatpush.msra.mxu0 %v556
        %825 = vmatpush.msra.mxu0 %v554
        %826 = vmatpush.msra.mxu0 %v552
        %827 = vmatmul.f32.gmra.mxu0 %v757
        %v828 = vpop.f32.mrf.mxu0
        %v829 = vadd.f32 %v809, %v828
        %830 = vdwg.mxu0
        %831 = vmatpush.msra.mxu0 %v614
        %832 = vmatpush.msra.mxu0 %v612
        %833 = vmatpush.msra.mxu0 %v610
        %834 = vmatpush.msra.mxu0 %v608
        %835 = vmatpush.msra.mxu0 %v606
        %836 = vmatpush.msra.mxu0 %v604
        %837 = vmatpush.msra.mxu0 %v602
        %838 = vmatpush.msra.mxu0 %v600
        %839 = vmatpush.msra.mxu0 %v598
        %840 = vmatpush.msra.mxu0 %v596
        %841 = vmatpush.msra.mxu0 %v594
        %842 = vmatpush.msra.mxu0 %v592
        %843 = vmatpush.msra.mxu0 %v590
        %844 = vmatpush.msra.mxu0 %v588
        %845 = vmatpush.msra.mxu0 %v586
        %846 = vmatpush.msra.mxu0 %v584
        %847 = vmatmul.f32.gmra.mxu0 %v758
        %v848 = vpop.f32.mrf.mxu0
        %v849 = vadd.f32 %v829, %v848
        %850 = vdwg.mxu0
        %851 = vmatpush.msra.mxu0 %v646
        %852 = vmatpush.msra.mxu0 %v644
        %853 = vmatpush.msra.mxu0 %v642
        %854 = vmatpush.msra.mxu0 %v640
        %855 = vmatpush.msra.mxu0 %v638
        %856 = vmatpush.msra.mxu0 %v636
        %857 = vmatpush.msra.mxu0 %v634
        %858 = vmatpush.msra.mxu0 %v632
        %859 = vmatpush.msra.mxu0 %v630
        %860 = vmatpush.msra.mxu0 %v628
        %861 = vmatpush.msra.mxu0 %v626
        %862 = vmatpush.msra.mxu0 %v624
        %863 = vmatpush.msra.mxu0 %v622
        %864 = vmatpush.msra.mxu0 %v620
        %865 = vmatpush.msra.mxu0 %v618
        %866 = vmatpush.msra.mxu0 %v616
        %867 = vmatmul.f32.gmra.mxu0 %v759
        %v868 = vpop.f32.mrf.mxu0
        %v869 = vadd.f32 %v849, %v868
        %870 = vdwg.mxu0
        %871 = vmatpush.msra.mxu0 %v678
        %872 = vmatpush.msra.mxu0 %v676
        %873 = vmatpush.msra.mxu0 %v674
        %874 = vmatpush.msra.mxu0 %v672
        %875 = vmatpush.msra.mxu0 %v670
        %876 = vmatpush.msra.mxu0 %v668
        %877 = vmatpush.msra.mxu0 %v666
        %878 = vmatpush.msra.mxu0 %v664
        %879 = vmatpush.msra.mxu0 %v662
        %880 = vmatpush.msra.mxu0 %v660
        %881 = vmatpush.msra.mxu0 %v658
        %882 = vmatpush.msra.mxu0 %v656
        %883 = vmatpush.msra.mxu0 %v654
        %884 = vmatpush.msra.mxu0 %v652
        %885 = vmatpush.msra.mxu0 %v650
        %886 = vmatpush.msra.mxu0 %v648
        %887 = vmatmul.f32.gmra.mxu0 %v760
        %v888 = vpop.f32.mrf.mxu0
        %v889 = vadd.f32 %v869, %v888
        %890 = vdwg.mxu0
        %891 = vmatpush.msra.mxu0 %v710
        %892 = vmatpush.msra.mxu0 %v708
        %893 = vmatpush.msra.mxu0 %v706
        %894 = vmatpush.msra.mxu0 %v704
        %895 = vmatpush.msra.mxu0 %v702
        %896 = vmatpush.msra.mxu0 %v700
        %897 = vmatpush.msra.mxu0 %v698
        %898 = vmatpush.msra.mxu0 %v696
        %899 = vmatpush.msra.mxu0 %v694
        %900 = vmatpush.msra.mxu0 %v692
        %901 = vmatpush.msra.mxu0 %v690
        %902 = vmatpush.msra.mxu0 %v688
        %903 = vmatpush.msra.mxu0 %v686
        %904 = vmatpush.msra.mxu0 %v684
        %905 = vmatpush.msra.mxu0 %v682
        %906 = vmatpush.msra.mxu0 %v680
        %907 = vmatmul.f32.gmra.mxu0 %v761
        %v908 = vpop.f32.mrf.mxu0
        %v909 = vadd.f32 %v889, %v908
        %910 = vdwg.mxu0
        %911 = vmatpush.msra.mxu0 %v742
        %912 = vmatpush.msra.mxu0 %v740
        %913 = vmatpush.msra.mxu0 %v738
        %914 = vmatpush.msra.mxu0 %v736
        %915 = vmatpush.msra.mxu0 %v734
        %916 = vmatpush.msra.mxu0 %v732
        %917 = vmatpush.msra.mxu0 %v730
        %918 = vmatpush.msra.mxu0 %v728
        %919 = vmatpush.msra.mxu0 %v726
        %920 = vmatpush.msra.mxu0 %v724
        %921 = vmatpush.msra.mxu0 %v722
        %922 = vmatpush.msra.mxu0 %v720
        %923 = vmatpush.msra.mxu0 %v718
        %924 = vmatpush.msra.mxu0 %v716
        %925 = vmatpush.msra.mxu0 %v714
        %926 = vmatpush.msra.mxu0 %v712
        %927 = vmatmul.f32.gmra.mxu0 %v762
        %v928 = vpop.f32.mrf.mxu0
        %v929 = vadd.f32 %v909, %v928
        %930 = vdwg.mxu0
        %931 = vmatpush.msra.mxu0 %v519
        %932 = vmatpush.msra.mxu0 %v517
        %933 = vmatpush.msra.mxu0 %v515
        %934 = vmatpush.msra.mxu0 %v513
        %935 = vmatpush.msra.mxu0 %v511
        %936 = vmatpush.msra.mxu0 %v509
        %937 = vmatpush.msra.mxu0 %v507
        %938 = vmatpush.msra.mxu0 %v505
        %939 = vmatpush.msra.mxu0 %v503
        %940 = vmatpush.msra.mxu0 %v501
        %941 = vmatpush.msra.mxu0 %v499
        %942 = vmatpush.msra.mxu0 %v497
        %943 = vmatpush.msra.mxu0 %v495
        %944 = vmatpush.msra.mxu0 %v493
        %945 = vmatpush.msra.mxu0 %v491
        %946 = vmatpush.msra.mxu0 %v489
        %947 = vmatmul.f32.gmra.mxu0 %v755
        %v948 = vpop.f32.mrf.mxu0
        %v949 = vadd.f32 %v747, %v948
        %950 = vdwg.mxu0
        %951 = vmatpush.msra.mxu0 %v551
        %952 = vmatpush.msra.mxu0 %v549
        %953 = vmatpush.msra.mxu0 %v547
        %954 = vmatpush.msra.mxu0 %v545
        %955 = vmatpush.msra.mxu0 %v543
        %956 = vmatpush.msra.mxu0 %v541
        %957 = vmatpush.msra.mxu0 %v539
        %958 = vmatpush.msra.mxu0 %v537
        %959 = vmatpush.msra.mxu0 %v535
        %960 = vmatpush.msra.mxu0 %v533
        %961 = vmatpush.msra.mxu0 %v531
        %962 = vmatpush.msra.mxu0 %v529
        %963 = vmatpush.msra.mxu0 %v527
        %964 = vmatpush.msra.mxu0 %v525
        %965 = vmatpush.msra.mxu0 %v523
        %966 = vmatpush.msra.mxu0 %v521
        %967 = vmatmul.f32.gmra.mxu0 %v756
        %v968 = vpop.f32.mrf.mxu0
        %v969 = vadd.f32 %v949, %v968
        %970 = vdwg.mxu0
        %971 = vmatpush.msra.mxu0 %v583
        %972 = vmatpush.msra.mxu0 %v581
        %973 = vmatpush.msra.mxu0 %v579
        %974 = vmatpush.msra.mxu0 %v577
        %975 = vmatpush.msra.mxu0 %v575
        %976 = vmatpush.msra.mxu0 %v573
        %977 = vmatpush.msra.mxu0 %v571
        %978 = vmatpush.msra.mxu0 %v569
        %979 = vmatpush.msra.mxu0 %v567
        %980 = vmatpush.msra.mxu0 %v565
        %981 = vmatpush.msra.mxu0 %v563
        %982 = vmatpush.msra.mxu0 %v561
        %983 = vmatpush.msra.mxu0 %v559
        %984 = vmatpush.msra.mxu0 %v557
        %985 = vmatpush.msra.mxu0 %v555
        %986 = vmatpush.msra.mxu0 %v553
        %987 = vmatmul.f32.gmra.mxu0 %v757
        %v988 = vpop.f32.mrf.mxu0
        %v989 = vadd.f32 %v969, %v988
        %990 = vdwg.mxu0
        %991 = vmatpush.msra.mxu0 %v615
        %992 = vmatpush.msra.mxu0 %v613
        %993 = vmatpush.msra.mxu0 %v611
        %994 = vmatpush.msra.mxu0 %v609
        %995 = vmatpush.msra.mxu0 %v607
        %996 = vmatpush.msra.mxu0 %v605
        %997 = vmatpush.msra.mxu0 %v603
        %998 = vmatpush.msra.mxu0 %v601
        %999 = vmatpush.msra.mxu0 %v599
        %1000 = vmatpush.msra.mxu0 %v597
        %1001 = vmatpush.msra.mxu0 %v595
        %1002 = vmatpush.msra.mxu0 %v593
        %1003 = vmatpush.msra.mxu0 %v591
        %1004 = vmatpush.msra.mxu0 %v589
        %1005 = vmatpush.msra.mxu0 %v587
        %1006 = vmatpush.msra.mxu0 %v585
        %1007 = vmatmul.f32.gmra.mxu0 %v758
        %v1008 = vpop.f32.mrf.mxu0
        %v1009 = vadd.f32 %v989, %v1008
        %1010 = vdwg.mxu0
        %1011 = vmatpush.msra.mxu0 %v647
        %1012 = vmatpush.msra.mxu0 %v645
        %1013 = vmatpush.msra.mxu0 %v643
        %1014 = vmatpush.msra.mxu0 %v641
        %1015 = vmatpush.msra.mxu0 %v639
        %1016 = vmatpush.msra.mxu0 %v637
        %1017 = vmatpush.msra.mxu0 %v635
        %1018 = vmatpush.msra.mxu0 %v633
        %1019 = vmatpush.msra.mxu0 %v631
        %1020 = vmatpush.msra.mxu0 %v629
        %1021 = vmatpush.msra.mxu0 %v627
        %1022 = vmatpush.msra.mxu0 %v625
        %1023 = vmatpush.msra.mxu0 %v623
        %1024 = vmatpush.msra.mxu0 %v621
        %1025 = vmatpush.msra.mxu0 %v619
        %1026 = vmatpush.msra.mxu0 %v617
        %1027 = vmatmul.f32.gmra.mxu0 %v759
        %v1028 = vpop.f32.mrf.mxu0
        %v1029 = vadd.f32 %v1009, %v1028
        %1030 = vdwg.mxu0
        %1031 = vmatpush.msra.mxu0 %v679
        %1032 = vmatpush.msra.mxu0 %v677
        %1033 = vmatpush.msra.mxu0 %v675
        %1034 = vmatpush.msra.mxu0 %v673
        %1035 = vmatpush.msra.mxu0 %v671
        %1036 = vmatpush.msra.mxu0 %v669
        %1037 = vmatpush.msra.mxu0 %v667
        %1038 = vmatpush.msra.mxu0 %v665
        %1039 = vmatpush.msra.mxu0 %v663
        %1040 = vmatpush.msra.mxu0 %v661
        %1041 = vmatpush.msra.mxu0 %v659
        %1042 = vmatpush.msra.mxu0 %v657
        %1043 = vmatpush.msra.mxu0 %v655
        %1044 = vmatpush.msra.mxu0 %v653
        %1045 = vmatpush.msra.mxu0 %v651
        %1046 = vmatpush.msra.mxu0 %v649
        %1047 = vmatmul.f32.gmra.mxu0 %v760
        %v1048 = vpop.f32.mrf.mxu0
        %v1049 = vadd.f32 %v1029, %v1048
        %1050 = vdwg.mxu0
        %1051 = vmatpush.msra.mxu0 %v711
        %1052 = vmatpush.msra.mxu0 %v709
        %1053 = vmatpush.msra.mxu0 %v707
        %1054 = vmatpush.msra.mxu0 %v705
        %1055 = vmatpush.msra.mxu0 %v703
        %1056 = vmatpush.msra.mxu0 %v701
        %1057 = vmatpush.msra.mxu0 %v699
        %1058 = vmatpush.msra.mxu0 %v697
        %1059 = vmatpush.msra.mxu0 %v695
        %1060 = vmatpush.msra.mxu0 %v693
        %1061 = vmatpush.msra.mxu0 %v691
        %1062 = vmatpush.msra.mxu0 %v689
        %1063 = vmatpush.msra.mxu0 %v687
        %1064 = vmatpush.msra.mxu0 %v685
        %1065 = vmatpush.msra.mxu0 %v683
        %1066 = vmatpush.msra.mxu0 %v681
        %1067 = vmatmul.f32.gmra.mxu0 %v761
        %v1068 = vpop.f32.mrf.mxu0
        %v1069 = vadd.f32 %v1049, %v1068
        %1070 = vdwg.mxu0
        %1071 = vmatpush.msra.mxu0 %v743
        %1072 = vmatpush.msra.mxu0 %v741
        %1073 = vmatpush.msra.mxu0 %v739
        %1074 = vmatpush.msra.mxu0 %v737
        %1075 = vmatpush.msra.mxu0 %v735
        %1076 = vmatpush.msra.mxu0 %v733
        %1077 = vmatpush.msra.mxu0 %v731
        %1078 = vmatpush.msra.mxu0 %v729
        %1079 = vmatpush.msra.mxu0 %v727
        %1080 = vmatpush.msra.mxu0 %v725
        %1081 = vmatpush.msra.mxu0 %v723
        %1082 = vmatpush.msra.mxu0 %v721
        %1083 = vmatpush.msra.mxu0 %v719
        %1084 = vmatpush.msra.mxu0 %v717
        %1085 = vmatpush.msra.mxu0 %v715
        %1086 = vmatpush.msra.mxu0 %v713
        %1087 = vmatmul.f32.gmra.mxu0 %v762
        %v1088 = vpop.f32.mrf.mxu0
        %v1089 = vadd.f32 %v1069, %v1088
        %1090 = vdwg.mxu0
        %v1091 = vmax.f32 %v929, 0.0
        %v1092 = vmax.f32 %v1089, 0.0
        %v1093 = vld [vmem:[%s400] sm:$0xff]
        %v1094 = vld [vmem:[%s400 + $0x8] sm:$0xff]
        %v1095 = vld [vmem:[%s400 + $0x10] sm:$0xff]
        %v1096 = vld [vmem:[%s400 + $0x18] sm:$0xff]
        %v1097 = vld [vmem:[%s400 + $0x20] sm:$0xff]
        %v1098 = vld [vmem:[%s400 + $0x28] sm:$0xff]
        %v1099 = vld [vmem:[%s400 + $0x30] sm:$0xff]
        %v1100 = vld [vmem:[%s400 + $0x38] sm:$0xff]
        %v1101 = vld [vmem:[%s400 + $0x40] sm:$0xff]
        %v1102 = vld [vmem:[%s400 + $0x48] sm:$0xff]
        %v1103 = vld [vmem:[%s400 + $0x50] sm:$0xff]
        %v1104 = vld [vmem:[%s400 + $0x58] sm:$0xff]
        %v1105 = vld [vmem:[%s400 + $0x60] sm:$0xff]
        %v1106 = vld [vmem:[%s400 + $0x68] sm:$0xff]
        %v1107 = vld [vmem:[%s400 + $0x70] sm:$0xff]
        %v1108 = vld [vmem:[%s400 + $0x78] sm:$0xff]
        %v1109 = vld [vmem:[%s400 + $0x80] sm:$0xff]
        %v1110 = vld [vmem:[%s400 + $0x88] sm:$0xff]
        %v1111 = vld [vmem:[%s400 + $0x90] sm:$0xff]
        %v1112 = vld [vmem:[%s400 + $0x98] sm:$0xff]
        %v1113 = vld [vmem:[%s400 + $0xa0] sm:$0xff]
        %v1114 = vld [vmem:[%s400 + $0xa8] sm:$0xff]
        %v1115 = vld [vmem:[%s400 + $0xb0] sm:$0xff]
        %v1116 = vld [vmem:[%s400 + $0xb8] sm:$0xff]
        %v1117 = vld [vmem:[%s400 + $0xc0] sm:$0xff]
        %v1118 = vld [vmem:[%s400 + $0xc8] sm:$0xff]
        %v1119 = vld [vmem:[%s400 + $0xd0] sm:$0xff]
        %v1120 = vld [vmem:[%s400 + $0xd8] sm:$0xff]
        %v1121 = vld [vmem:[%s400 + $0xe0] sm:$0xff]
        %v1122 = vld [vmem:[%s400 + $0xe8] sm:$0xff]
        %v1123 = vld [vmem:[%s400 + $0xf0] sm:$0xff]
        %v1124 = vld [vmem:[%s400 + $0xf8] sm:$0xff]
        %v1125 = vld [vmem:[%s409] sm:$0x1]
        %v1127 = vperm.slane %v1125, 0
        %1129 = vmatpush.msra.mxu0 %v1108
        %1130 = vmatpush.msra.mxu0 %v1107
        %1131 = vmatpush.msra.mxu0 %v1106
        %1132 = vmatpush.msra.mxu0 %v1105
        %1133 = vmatpush.msra.mxu0 %v1104
        %1134 = vmatpush.msra.mxu0 %v1103
        %1135 = vmatpush.msra.mxu0 %v1102
        %1136 = vmatpush.msra.mxu0 %v1101
        %1137 = vmatpush.msra.mxu0 %v1100
        %1138 = vmatpush.msra.mxu0 %v1099
        %1139 = vmatpush.msra.mxu0 %v1098
        %1140 = vmatpush.msra.mxu0 %v1097
        %1141 = vmatpush.msra.mxu0 %v1096
        %1142 = vmatpush.msra.mxu0 %v1095
        %1143 = vmatpush.msra.mxu0 %v1094
        %1144 = vmatpush.msra.mxu0 %v1093
        %1145 = vmatmul.f32.gmra.mxu0 %v1091
        %v1146 = vpop.f32.mrf.mxu0
        %v1147 = vadd.f32 %v1127, %v1146
        %1148 = vdwg.mxu0
        %1149 = vmatpush.msra.mxu0 %v1124
        %1150 = vmatpush.msra.mxu0 %v1123
        %1151 = vmatpush.msra.mxu0 %v1122
        %1152 = vmatpush.msra.mxu0 %v1121
        %1153 = vmatpush.msra.mxu0 %v1120
        %1154 = vmatpush.msra.mxu0 %v1119
        %1155 = vmatpush.msra.mxu0 %v1118
        %1156 = vmatpush.msra.mxu0 %v1117
        %1157 = vmatpush.msra.mxu0 %v1116
        %1158 = vmatpush.msra.mxu0 %v1115
        %1159 = vmatpush.msra.mxu0 %v1114
        %1160 = vmatpush.msra.mxu0 %v1113
        %1161 = vmatpush.msra.mxu0 %v1112
        %1162 = vmatpush.msra.mxu0 %v1111
        %1163 = vmatpush.msra.mxu0 %v1110
        %1164 = vmatpush.msra.mxu0 %v1109
        %1165 = vmatmul.f32.gmra.mxu0 %v1092
        %v1166 = vpop.f32.mrf.mxu0
        %v1167 = vadd.f32 %v1147, %v1166
        %1168 = vdwg.mxu0
        %v1169 = vmax.f32 %v1167, 0.0
        %v1170 = vld [vmem:[%s419] sm:$0xff]
        %v1171 = vld [vmem:[%s419 + $0x8] sm:$0xff]
        %v1172 = vld [vmem:[%s419 + $0x10] sm:$0xff]
        %v1173 = vld [vmem:[%s419 + $0x18] sm:$0xff]
        %v1174 = vld [vmem:[%s419 + $0x20] sm:$0xff]
        %v1175 = vld [vmem:[%s419 + $0x28] sm:$0xff]
        %v1176 = vld [vmem:[%s419 + $0x30] sm:$0xff]
        %v1177 = vld [vmem:[%s419 + $0x38] sm:$0xff]
        %v1178 = vld [vmem:[%s419 + $0x40] sm:$0xff]
        %v1179 = vld [vmem:[%s419 + $0x48] sm:$0xff]
        %v1180 = vld [vmem:[%s419 + $0x50] sm:$0xff]
        %v1181 = vld [vmem:[%s419 + $0x58] sm:$0xff]
        %v1182 = vld [vmem:[%s419 + $0x60] sm:$0xff]
        %v1183 = vld [vmem:[%s419 + $0x68] sm:$0xff]
        %v1184 = vld [vmem:[%s419 + $0x70] sm:$0xff]
        %v1185 = vld [vmem:[%s419 + $0x78] sm:$0xff]
        %v1186 = vld [vmem:[%s428] sm:$0x1]
        %v1188 = vperm.slane %v1186, 0
        %1190 = vmatpush.msra.mxu0 %v1185
        %1191 = vmatpush.msra.mxu0 %v1184
        %1192 = vmatpush.msra.mxu0 %v1183
        %1193 = vmatpush.msra.mxu0 %v1182
        %1194 = vmatpush.msra.mxu0 %v1181
        %1195 = vmatpush.msra.mxu0 %v1180
        %1196 = vmatpush.msra.mxu0 %v1179
        %1197 = vmatpush.msra.mxu0 %v1178
        %1198 = vmatpush.msra.mxu0 %v1177
        %1199 = vmatpush.msra.mxu0 %v1176
        %1200 = vmatpush.msra.mxu0 %v1175
        %1201 = vmatpush.msra.mxu0 %v1174
        %1202 = vmatpush.msra.mxu0 %v1173
        %1203 = vmatpush.msra.mxu0 %v1172
        %1204 = vmatpush.msra.mxu0 %v1171
        %1205 = vmatpush.msra.mxu0 %v1170
        %1206 = vmatmul.f32.gmra.mxu0 %v1169
        %v1207 = vpop.f32.mrf.mxu0
        %v1208 = vadd.f32 %v1188, %v1207
        %1209 = vdwg.mxu0
        %1210 = vst [vmem:[%s485] sm:$0x3] %v1208
        %p1211 = scmp.lt.s32.totalorder %s30, 4
        %s1212 = scalar_select %p1211, %s30, 4
        %s1213 = smul.addr %s1212, 2
        %s1214 = scalar_lea.vmem %s7, %s1213
        // Predicated region
        $region73: #{resnet18_heads_forward.1} parent=47 // pred_check
          %p1215 = pneg %p225
        $region74: #{resnet18_heads_forward.1} parent=47 // pred_check_branch
          %1217 = sbr.rel (%p1215) target = $region76
        $region75: #{resnet18_heads_forward.1} parent=47 // pred_region
          _
        $region76: #{resnet18_heads_forward.1} parent=47 // pred_fallthru
          _
      $region48: #{resnet18_heads_forward.1} parent=5 // pred_fallthru
        _
      %p1218 = scmp.le.s32.totalorder 2, %s25
      // Predicated region
      $region77: #{resnet18_heads_forward.1} parent=5 // pred_check
        %p1219 = pneg %p1218
      $region78: #{resnet18_heads_forward.1} parent=5 // pred_check_branch
        %1221 = sbr.rel (%p1219) target = $region80
      $region79: #{resnet18_heads_forward.1} parent=5 // pred_region
        %s1222 = ssub.s32 %s25, 2
        // Predicated region
        $region81: #{resnet18_heads_forward.1} parent=79 // pred_check
          %p1223 = pneg %p231
        $region82: #{resnet18_heads_forward.1} parent=79 // pred_check_branch
          %1225 = sbr.rel (%p1223) target = $region84
        $region83: #{resnet18_heads_forward.1} parent=79 // pred_region
          %p1226 = scmp.lt.s32.totalorder %s31, 4
          %s1227 = scalar_select %p1226, %s31, 4
          %s1228 = smul.addr %s1227, 2
          %s1229 = scalar_lea.vmem %s7, %s1228
        $region84: #{resnet18_heads_forward.1} parent=79 // pred_fallthru
          _
      $region80: #{resnet18_heads_forward.1} parent=5 // pred_fallthru
        _
    $region6: #{resnet18_heads_forward.1} parent=1 // loop_footer
      %s29 = sadd.s32 1, %s25
    $region7: #{resnet18_heads_forward.1} parent=1 // loop_footer_branch
      %24 = sbr.rel target = $region3
    $region8: #{resnet18_heads_forward.1} parent=1 // loop_exit
      _
    %1230 = vsyncpa [#allocation3], 1
    %s1231 = scalar_lea.sflag [#allocation3], 1
    %1232 = vsyncpa %s1231, 1
    %1233 = vsyncpa [#allocation5], 1
    %s1234 = scalar_lea.sflag [#allocation5], 1
    %1235 = vsyncpa %s1234, 1
    %1236 = vsyncpa [#allocation8], 1
    %s1237 = scalar_lea.sflag [#allocation8], 1
    %1238 = vsyncpa %s1237, 1
    %1239 = vsyncpa [#allocation11], 1
    %s1240 = scalar_lea.sflag [#allocation11], 1
    %1241 = vsyncpa %s1240, 1

</llo_original>
